<compile_context>
chip_gen: v7x
topology: tpu7x:2x2x1
jax: 0.10.0
libtpu: 0.0.40
codegen_flags: <defaults>
</compile_context>

<pallas_src>
import functools

import jax
import jax.numpy as jnp
from jax.experimental import pallas as pl
from jax.experimental.pallas import tpu as pltpu


def _round_up(x, m):
    return ((x + m - 1) // m) * m


def _cdiv(a, b):
    return -(-a // b)


def make_autoencoder_kernel(n_enc, n_dec, latent_pad, out_pad, matmul_dtype):
    """Fused kernel: x -> encoder layers -> latent -> decoder layers -> recon."""
    n_layers = n_enc + n_dec

    def kernel(x_ref, *refs):
        # refs layout: w0, b0, ..., w_{n-1}, b_{n-1}, recon_ref, latent_ref
        wb = refs[: 2 * n_layers]
        recon_ref = refs[2 * n_layers]
        latent_ref = refs[2 * n_layers + 1]

        h = x_ref[...]
        for li in range(n_layers):
            w = wb[2 * li][...]
            b = wb[2 * li + 1][...]
            # MXU matmul (optionally bf16 operands) with f32 accumulation,
            # then bias + ReLU on the VPU in f32.
            h = jnp.dot(
                h.astype(matmul_dtype),
                w.astype(matmul_dtype),
                preferred_element_type=jnp.float32,
            ) + b
            h = jnp.maximum(h, 0.0)
            if li == n_enc - 1:
                # Latent (post-ReLU) output: pad to a 128-lane-dense slab so
                # the HBM store is unmasked full-lane vst.
                lat = h
                if latent_pad > lat.shape[1]:
                    lat = jnp.pad(lat, ((0, 0), (0, latent_pad - lat.shape[1])))
                latent_ref[...] = lat.astype(latent_ref.dtype)
        if out_pad > h.shape[1]:
            h = jnp.pad(h, ((0, 0), (0, out_pad - h.shape[1])))
        recon_ref[...] = h.astype(recon_ref.dtype)

    return kernel


def auto_encoder_forward(
    x,
    enc_params,
    dec_params,
    *,
    tb_max=1024,
    min_tiles=1,          # pass >=2 on v7x so both TensorCores get a tile
    matmul_dtype=jnp.float32,  # jnp.bfloat16 recommended on v6e/v7x (looser tol)
):
    """Fused autoEncoder forward.

    x: (B, Din) float32.
    enc_params / dec_params: lists of (w, b) with w (in,out), b (1,out) float32.
    Returns (reconstruction (B, Din), latent_space (B, latent_dim)).
    """
    B, Din = x.shape
    params = list(enc_params) + list(dec_params)
    n_enc, n_dec = len(enc_params), len(dec_params)
    dims = [Din] + [w.shape[1] for (w, _) in params]
    latent_dim = dims[n_enc]
    out_dim = dims[-1]
    latent_pad = _round_up(latent_dim, 128)
    out_pad = _round_up(out_dim, 128)

    # Balanced, padding-aware batch tiling: as few grid steps as possible
    # (per-step overhead ~0.35 us) without padding B up to a fixed multiple.
    n_tiles = max(min_tiles, _cdiv(B, tb_max))
    tb = _round_up(_cdiv(B, n_tiles), 8)
    Bp = tb * n_tiles
    x_p = jnp.pad(x, ((0, Bp - B), (0, 0))) if Bp != B else x

    flat_params = []
    for (w, b) in params:
        flat_params += [w, b]

    in_specs = [pl.BlockSpec((tb, Din), lambda i: (i, 0))]
    for (w, b) in params:
        # Full-array, grid-invariant blocks: weights/biases stay VMEM-resident.
        in_specs.append(pl.BlockSpec(w.shape, lambda i: (0, 0)))
        in_specs.append(pl.BlockSpec(b.shape, lambda i: (0, 0)))

    out_specs = (
        pl.BlockSpec((tb, out_pad), lambda i: (i, 0)),
        pl.BlockSpec((tb, latent_pad), lambda i: (i, 0)),
    )

    flops = 2 * Bp * sum(dims[i] * dims[i + 1] for i in range(len(dims) - 1))
    bytes_accessed = 4 * (
        Bp * Din
        + sum(w.size + b.size for (w, b) in params)
        + Bp * (out_pad + latent_pad)
    )

    recon, latent = pl.pallas_call(
        make_autoencoder_kernel(n_enc, n_dec, latent_pad, out_pad, matmul_dtype),
        out_shape=(
            jax.ShapeDtypeStruct((Bp, out_pad), x.dtype),
            jax.ShapeDtypeStruct((Bp, latent_pad), x.dtype),
        ),
        grid=(n_tiles,),
        in_specs=in_specs,
        out_specs=out_specs,
        compiler_params=pltpu.CompilerParams(
            dimension_semantics=("parallel",),
        ),
        cost_estimate=pl.CostEstimate(
            flops=flops, transcendentals=0, bytes_accessed=bytes_accessed
        ),
    )(x_p, *flat_params)

    recon = recon[:B, :out_dim]
    latent = latent[:B, :latent_dim]
    return recon, latent


def init_mlp_params(key, dims):
    """Deterministic init mimicking nn.Linear defaults: U(-1/sqrt(in), 1/sqrt(in))."""
    params = []
    for i in range(len(dims) - 1):
        din, dout = dims[i], dims[i + 1]
        key, kw, kb = jax.random.split(key, 3)
        bound = 1.0 / jnp.sqrt(jnp.float32(din))
        # stored as (in, out) == PyTorch weight (out, in) transposed
        w = jax.random.uniform(kw, (din, dout), jnp.float32, -bound, bound)
        b = jax.random.uniform(kb, (1, dout), jnp.float32, -bound, bound)
        params.append((w, b))
    return key, params


if __name__ == "__main__":
    # autoEncoder(layer_list=[128, 64, 32], act='ReLU')
    layer_list = [128, 64, 32]
    encoder_dims = layer_list
    decoder_dims = layer_list[::-1]
    batch = 8

    key = jax.random.PRNGKey(0)
    key, enc_params = init_mlp_params(key, encoder_dims)
    key, dec_params = init_mlp_params(key, decoder_dims)

    key, kx = jax.random.split(key)
    x = jax.random.normal(kx, (batch, layer_list[0]), jnp.float32)

    fwd = jax.jit(functools.partial(auto_encoder_forward))
    reconstruction, latent_space = fwd(x, enc_params, dec_params)
    jax.block_until_ready((reconstruction, latent_space))

    assert reconstruction.shape == (batch, layer_list[0])
    assert latent_space.shape == (batch, layer_list[-1])

    # Sanity check vs. plain-JAX reference of the same math
    # (ReLU after every layer, matching MLP.forward with act='ReLU').
    def ref_mlp(xv, params):
        for (w, b) in params:
            xv = jnp.maximum(xv @ w + b, 0.0)
        return xv

    ref_latent = ref_mlp(x, enc_params)
    ref_recon = ref_mlp(ref_latent, dec_params)
    assert jnp.allclose(latent_space, ref_latent, atol=1e-5, rtol=1e-5)
    assert jnp.allclose(reconstruction, ref_recon, atol=1e-5, rtol=1e-5)

    print("KERNEL_OK")
</pallas_src>

<mosaic_0001>
module attributes {stable_mosaic.version = 11 : i64} {
  func.func @kernel(%arg0: i32, %arg1: memref<8x128xf32, #tpu.memory_space<vmem>>, %arg2: memref<128x64xf32, #tpu.memory_space<vmem>>, %arg3: memref<1x64xf32, #tpu.memory_space<vmem>>, %arg4: memref<64x32xf32, #tpu.memory_space<vmem>>, %arg5: memref<1x32xf32, #tpu.memory_space<vmem>>, %arg6: memref<32x64xf32, #tpu.memory_space<vmem>>, %arg7: memref<1x64xf32, #tpu.memory_space<vmem>>, %arg8: memref<64x128xf32, #tpu.memory_space<vmem>>, %arg9: memref<1x128xf32, #tpu.memory_space<vmem>>, %arg10: memref<8x128xf32, #tpu.memory_space<vmem>>, %arg11: memref<8x128xf32, #tpu.memory_space<vmem>>) attributes {dimension_semantics = [#tpu.dimension_semantics<parallel>], iteration_bounds = array<i64: 1>, scalar_prefetch = 0 : i64, scratch_operands = 0 : i64, tpu.core_type = #tpu.core_type<tc>, window_params = [{transform_indices = @transform_0, window_bounds = array<i64: 8, 128>}, {pipeline_mode = #tpu.pipeline_mode<synchronous>, transform_indices = @transform_1, window_bounds = array<i64: 128, 64>}, {pipeline_mode = #tpu.pipeline_mode<synchronous>, transform_indices = @transform_2, window_bounds = array<i64: 1, 64>}, {pipeline_mode = #tpu.pipeline_mode<synchronous>, transform_indices = @transform_3, window_bounds = array<i64: 64, 32>}, {pipeline_mode = #tpu.pipeline_mode<synchronous>, transform_indices = @transform_4, window_bounds = array<i64: 1, 32>}, {pipeline_mode = #tpu.pipeline_mode<synchronous>, transform_indices = @transform_5, window_bounds = array<i64: 32, 64>}, {pipeline_mode = #tpu.pipeline_mode<synchronous>, transform_indices = @transform_6, window_bounds = array<i64: 1, 64>}, {pipeline_mode = #tpu.pipeline_mode<synchronous>, transform_indices = @transform_7, window_bounds = array<i64: 64, 128>}, {pipeline_mode = #tpu.pipeline_mode<synchronous>, transform_indices = @transform_8, window_bounds = array<i64: 1, 128>}, {transform_indices = @transform_9, window_bounds = array<i64: 8, 128>}, {transform_indices = @transform_10, window_bounds = array<i64: 8, 128>}]} {
    %c0 = arith.constant 0 : index
    %c0_0 = arith.constant 0 : index
    %0 = vector.load %arg1[%c0, %c0_0] : memref<8x128xf32, #tpu.memory_space<vmem>>, vector<8x128xf32>
    %c0_1 = arith.constant 0 : index
    %c0_2 = arith.constant 0 : index
    %1 = vector.load %arg2[%c0_1, %c0_2] : memref<128x64xf32, #tpu.memory_space<vmem>>, vector<128x64xf32>
    %c0_3 = arith.constant 0 : index
    %c0_4 = arith.constant 0 : index
    %2 = vector.load %arg3[%c0_3, %c0_4] : memref<1x64xf32, #tpu.memory_space<vmem>>, vector<1x64xf32>
    %cst = arith.constant dense<0.000000e+00> : vector<8x64xf32>
    %3 = tpu.matmul %0, %1, %cst {dimension_numbers = #tpu.dot_dimension_numbers<[1], [0], [0], [1], [0, 0, 1, 1], [], []>} : vector<8x128xf32>, vector<128x64xf32>, vector<8x64xf32> -> vector<8x64xf32>
    %4 = vector.broadcast %2 : vector<1x64xf32> to vector<8x64xf32>
    %5 = arith.addf %3, %4 : vector<8x64xf32>
    %cst_5 = arith.constant 0.000000e+00 : f32
    %6 = vector.broadcast %cst_5 : f32 to vector<8x64xf32>
    %7 = arith.maximumf %5, %6 : vector<8x64xf32>
    %c0_6 = arith.constant 0 : index
    %c0_7 = arith.constant 0 : index
    %8 = vector.load %arg4[%c0_6, %c0_7] : memref<64x32xf32, #tpu.memory_space<vmem>>, vector<64x32xf32>
    %c0_8 = arith.constant 0 : index
    %c0_9 = arith.constant 0 : index
    %9 = vector.load %arg5[%c0_8, %c0_9] : memref<1x32xf32, #tpu.memory_space<vmem>>, vector<1x32xf32>
    %cst_10 = arith.constant dense<0.000000e+00> : vector<8x32xf32>
    %10 = tpu.matmul %7, %8, %cst_10 {dimension_numbers = #tpu.dot_dimension_numbers<[1], [0], [0], [1], [0, 0, 1, 1], [], []>} : vector<8x64xf32>, vector<64x32xf32>, vector<8x32xf32> -> vector<8x32xf32>
    %11 = vector.broadcast %9 : vector<1x32xf32> to vector<8x32xf32>
    %12 = arith.addf %10, %11 : vector<8x32xf32>
    %cst_11 = arith.constant 0.000000e+00 : f32
    %13 = vector.broadcast %cst_11 : f32 to vector<8x32xf32>
    %14 = arith.maximumf %12, %13 : vector<8x32xf32>
    %c0_i32 = arith.constant 0 : i32
    %15 = arith.sitofp %c0_i32 : i32 to f32
    %16 = vector.broadcast %15 : f32 to vector<8x96xf32>
    %17 = tpu.concatenate %14, %16 in 1 : vector<8x32xf32>, vector<8x96xf32> -> vector<8x128xf32>
    %c0_12 = arith.constant 0 : index
    %c0_13 = arith.constant 0 : index
    %18 = vector.load %arg11[%c0_12, %c0_13] : memref<8x128xf32, #tpu.memory_space<vmem>>, vector<8x128xf32>
    tpu.vector_store %arg11[%c0_12, %c0_13], %17 {strides = array<i32>} : memref<8x128xf32, #tpu.memory_space<vmem>>, vector<8x128xf32>,
    %c0_14 = arith.constant 0 : index
    %c0_15 = arith.constant 0 : index
    %19 = vector.load %arg6[%c0_14, %c0_15] : memref<32x64xf32, #tpu.memory_space<vmem>>, vector<32x64xf32>
    %c0_16 = arith.constant 0 : index
    %c0_17 = arith.constant 0 : index
    %20 = vector.load %arg7[%c0_16, %c0_17] : memref<1x64xf32, #tpu.memory_space<vmem>>, vector<1x64xf32>
    %cst_18 = arith.constant dense<0.000000e+00> : vector<8x64xf32>
    %21 = tpu.matmul %14, %19, %cst_18 {dimension_numbers = #tpu.dot_dimension_numbers<[1], [0], [0], [1], [0, 0, 1, 1], [], []>} : vector<8x32xf32>, vector<32x64xf32>, vector<8x64xf32> -> vector<8x64xf32>
    %22 = vector.broadcast %20 : vector<1x64xf32> to vector<8x64xf32>
    %23 = arith.addf %21, %22 : vector<8x64xf32>
    %cst_19 = arith.constant 0.000000e+00 : f32
    %24 = vector.broadcast %cst_19 : f32 to vector<8x64xf32>
    %25 = arith.maximumf %23, %24 : vector<8x64xf32>
    %c0_20 = arith.constant 0 : index
    %c0_21 = arith.constant 0 : index
    %26 = vector.load %arg8[%c0_20, %c0_21] : memref<64x128xf32, #tpu.memory_space<vmem>>, vector<64x128xf32>
    %c0_22 = arith.constant 0 : index
    %c0_23 = arith.constant 0 : index
    %27 = vector.load %arg9[%c0_22, %c0_23] : memref<1x128xf32, #tpu.memory_space<vmem>>, vector<1x128xf32>
    %cst_24 = arith.constant dense<0.000000e+00> : vector<8x128xf32>
    %28 = tpu.matmul %25, %26, %cst_24 {dimension_numbers = #tpu.dot_dimension_numbers<[1], [0], [0], [1], [0, 0, 1, 1], [], []>} : vector<8x64xf32>, vector<64x128xf32>, vector<8x128xf32> -> vector<8x128xf32>
    %29 = vector.broadcast %27 : vector<1x128xf32> to vector<8x128xf32>
    %30 = arith.addf %28, %29 : vector<8x128xf32>
    %cst_25 = arith.constant 0.000000e+00 : f32
    %31 = vector.broadcast %cst_25 : f32 to vector<8x128xf32>
    %32 = arith.maximumf %30, %31 : vector<8x128xf32>
    %c0_26 = arith.constant 0 : index
    %c0_27 = arith.constant 0 : index
    %33 = vector.load %arg10[%c0_26, %c0_27] : memref<8x128xf32, #tpu.memory_space<vmem>>, vector<8x128xf32>
    tpu.vector_store %arg10[%c0_26, %c0_27], %32 {strides = array<i32>} : memref<8x128xf32, #tpu.memory_space<vmem>>, vector<8x128xf32>,
    return
  }
  func.func @transform_0(%arg0: i32) -> (i32, i32) {
    %c0_i32 = arith.constant 0 : i32
    %c0_i32_0 = arith.constant 0 : i32
    return %arg0, %c0_i32 : i32, i32
  }
  func.func @transform_1(%arg0: i32) -> (i32, i32) {
    %c0_i32 = arith.constant 0 : i32
    %c0_i32_0 = arith.constant 0 : i32
    %c0_i32_1 = arith.constant 0 : i32
    return %c0_i32, %c0_i32_0 : i32, i32
  }
  func.func @transform_2(%arg0: i32) -> (i32, i32) {
    %c0_i32 = arith.constant 0 : i32
    %c0_i32_0 = arith.constant 0 : i32
    %c0_i32_1 = arith.constant 0 : i32
    return %c0_i32, %c0_i32_0 : i32, i32
  }
  func.func @transform_3(%arg0: i32) -> (i32, i32) {
    %c0_i32 = arith.constant 0 : i32
    %c0_i32_0 = arith.constant 0 : i32
    %c0_i32_1 = arith.constant 0 : i32
    return %c0_i32, %c0_i32_0 : i32, i32
  }
  func.func @transform_4(%arg0: i32) -> (i32, i32) {
    %c0_i32 = arith.constant 0 : i32
    %c0_i32_0 = arith.constant 0 : i32
    %c0_i32_1 = arith.constant 0 : i32
    return %c0_i32, %c0_i32_0 : i32, i32
  }
  func.func @transform_5(%arg0: i32) -> (i32, i32) {
    %c0_i32 = arith.constant 0 : i32
    %c0_i32_0 = arith.constant 0 : i32
    %c0_i32_1 = arith.constant 0 : i32
    return %c0_i32, %c0_i32_0 : i32, i32
  }
  func.func @transform_6(%arg0: i32) -> (i32, i32) {
    %c0_i32 = arith.constant 0 : i32
    %c0_i32_0 = arith.constant 0 : i32
    %c0_i32_1 = arith.constant 0 : i32
    return %c0_i32, %c0_i32_0 : i32, i32
  }
  func.func @transform_7(%arg0: i32) -> (i32, i32) {
    %c0_i32 = arith.constant 0 : i32
    %c0_i32_0 = arith.constant 0 : i32
    %c0_i32_1 = arith.constant 0 : i32
    return %c0_i32, %c0_i32_0 : i32, i32
  }
  func.func @transform_8(%arg0: i32) -> (i32, i32) {
    %c0_i32 = arith.constant 0 : i32
    %c0_i32_0 = arith.constant 0 : i32
    %c0_i32_1 = arith.constant 0 : i32
    return %c0_i32, %c0_i32_0 : i32, i32
  }
  func.func @transform_9(%arg0: i32) -> (i32, i32) {
    %c0_i32 = arith.constant 0 : i32
    %c0_i32_0 = arith.constant 0 : i32
    return %arg0, %c0_i32 : i32, i32
  }
  func.func @transform_10(%arg0: i32) -> (i32, i32) {
    %c0_i32 = arith.constant 0 : i32
    %c0_i32_0 = arith.constant 0 : i32
    return %arg0, %c0_i32 : i32, i32
  }
}

</mosaic_0001>

<llo_original>
// kernel: auto_encoder_forward.1
$region0: #{auto_encoder_forward.1}
  #allocation0 [shape = 'u32[]', space=smem, size = 0x4, offset = 0x4, fixed_abs, tag = 'smem constant byte address 0x4 - core index']
  #allocation1 [shape = 'u32[144,128]{1,0:T(1,128)}', space=vmem, size = 0x12000, scoped, tag = 'internal scratch']
  %s0 = inlined_call_operand.vmem [shape: f32[8,128], index: 0, kind: input, shape index: {}]
  %s1 = inlined_call_operand.vmem [shape: f32[128,64], index: 1, kind: input, shape index: {}]
  %s2 = inlined_call_operand.vmem [shape: f32[1,64], index: 2, kind: input, shape index: {}]
  %s3 = inlined_call_operand.vmem [shape: f32[64,32], index: 3, kind: input, shape index: {}]
  %s4 = inlined_call_operand.vmem [shape: f32[1,32], index: 4, kind: input, shape index: {}]
  %s5 = inlined_call_operand.vmem [shape: f32[32,64], index: 5, kind: input, shape index: {}]
  %s6 = inlined_call_operand.vmem [shape: f32[1,64], index: 6, kind: input, shape index: {}]
  %s7 = inlined_call_operand.vmem [shape: f32[64,128], index: 7, kind: input, shape index: {}]
  %s8 = inlined_call_operand.vmem [shape: f32[1,128], index: 8, kind: input, shape index: {}]
  %s9 = inlined_call_operand.hbm [shape: f32[8,128], index: 9, kind: output, shape index: {0}]
  %s10 = inlined_call_operand.hbm [shape: f32[8,128], index: 10, kind: output, shape index: {1}]
  %11 = xla_tuple %s9, %s10
  %s12 = sld [smem:[#allocation0]]
  $region54: #{auto_encoder_forward.1} parent=0
    _
  %s14 = ssub.s32 1, %s12
  %s15 = scalar_select 0, %s14, %s12
  $region1: #{auto_encoder_forward.1} parent=0
    #allocation2 [shape = 'u8[4096]{0}', space=vmem, size = 0x1000, scoped, tag = 'output window, operand 0, single buffered']
    #allocation3 [shape = 's32[1]{0}', space=sflag, size = 0x4, scoped, tag = 'scoped memory for auto_encoder_forward.1']
    #allocation4 [shape = 'u8[4096]{0}', space=vmem, size = 0x1000, scoped, tag = 'output window, operand 1, single buffered']
    #allocation5 [shape = 's32[1]{0}', space=sflag, size = 0x4, scoped, tag = 'scoped memory for auto_encoder_forward.1']
    %16 = vsyncpa [#allocation3], 0
    %17 = vsyncpa [#allocation5], 0
    // Predicated region
    $region2: #{auto_encoder_forward.1} parent=1 // pred_check
      _
    $region3: #{auto_encoder_forward.1} parent=1 // pred_check_branch
      %19 = sbr.rel (0) target = $region5
    $region4: #{auto_encoder_forward.1} parent=1 // pred_region
      _
    $region5: #{auto_encoder_forward.1} parent=1 // pred_fallthru
      _
    // Predicated region
    $region6: #{auto_encoder_forward.1} parent=1 // pred_check
      _
    $region7: #{auto_encoder_forward.1} parent=1 // pred_check_branch
      %21 = sbr.rel (0) target = $region9
    $region8: #{auto_encoder_forward.1} parent=1 // pred_region
      _
    $region9: #{auto_encoder_forward.1} parent=1 // pred_fallthru
      _
    // Predicated region
    $region10: #{auto_encoder_forward.1} parent=1 // pred_check
      _
    $region11: #{auto_encoder_forward.1} parent=1 // pred_check_branch
      %23 = sbr.rel (0) target = $region13
    $region12: #{auto_encoder_forward.1} parent=1 // pred_region
      _
    $region13: #{auto_encoder_forward.1} parent=1 // pred_fallthru
      _
    // Predicated region
    $region14: #{auto_encoder_forward.1} parent=1 // pred_check
      _
    $region15: #{auto_encoder_forward.1} parent=1 // pred_check_branch
      %25 = sbr.rel (0) target = $region17
    $region16: #{auto_encoder_forward.1} parent=1 // pred_region
      _
    $region17: #{auto_encoder_forward.1} parent=1 // pred_fallthru
      _
    // Predicated region
    $region18: #{auto_encoder_forward.1} parent=1 // pred_check
      _
    $region19: #{auto_encoder_forward.1} parent=1 // pred_check_branch
      %27 = sbr.rel (0) target = $region21
    $region20: #{auto_encoder_forward.1} parent=1 // pred_region
      _
    $region21: #{auto_encoder_forward.1} parent=1 // pred_fallthru
      _
    // Predicated region
    $region22: #{auto_encoder_forward.1} parent=1 // pred_check
      _
    $region23: #{auto_encoder_forward.1} parent=1 // pred_check_branch
      %29 = sbr.rel (0) target = $region25
    $region24: #{auto_encoder_forward.1} parent=1 // pred_region
      _
    $region25: #{auto_encoder_forward.1} parent=1 // pred_fallthru
      _
    // Predicated region
    $region26: #{auto_encoder_forward.1} parent=1 // pred_check
      _
    $region27: #{auto_encoder_forward.1} parent=1 // pred_check_branch
      %31 = sbr.rel (0) target = $region29
    $region28: #{auto_encoder_forward.1} parent=1 // pred_region
      _
    $region29: #{auto_encoder_forward.1} parent=1 // pred_fallthru
      _
    // Predicated region
    $region30: #{auto_encoder_forward.1} parent=1 // pred_check
      _
    $region31: #{auto_encoder_forward.1} parent=1 // pred_check_branch
      %33 = sbr.rel (0) target = $region33
    $region32: #{auto_encoder_forward.1} parent=1 // pred_region
      _
    $region33: #{auto_encoder_forward.1} parent=1 // pred_fallthru
      _
    // Predicated region
    $region34: #{auto_encoder_forward.1} parent=1 // pred_check
      _
    $region35: #{auto_encoder_forward.1} parent=1 // pred_check_branch
      %35 = sbr.rel (0) target = $region37
    $region36: #{auto_encoder_forward.1} parent=1 // pred_region
      _
    $region37: #{auto_encoder_forward.1} parent=1 // pred_fallthru
      _
    %v36 = vld [vmem:[%s0] sm:$0xff]
    %v37 = vld [vmem:[%s1] sm:$0xff]
    %v38 = vld [vmem:[%s1 + $0x8] sm:$0xff]
    %v39 = vld [vmem:[%s1 + $0x10] sm:$0xff]
    %v40 = vld [vmem:[%s1 + $0x18] sm:$0xff]
    %v41 = vld [vmem:[%s1 + $0x20] sm:$0xff]
    %v42 = vld [vmem:[%s1 + $0x28] sm:$0xff]
    %v43 = vld [vmem:[%s1 + $0x30] sm:$0xff]
    %v44 = vld [vmem:[%s1 + $0x38] sm:$0xff]
    %v45 = vld [vmem:[%s1 + $0x40] sm:$0xff]
    %v46 = vld [vmem:[%s1 + $0x48] sm:$0xff]
    %v47 = vld [vmem:[%s1 + $0x50] sm:$0xff]
    %v48 = vld [vmem:[%s1 + $0x58] sm:$0xff]
    %v49 = vld [vmem:[%s1 + $0x60] sm:$0xff]
    %v50 = vld [vmem:[%s1 + $0x68] sm:$0xff]
    %v51 = vld [vmem:[%s1 + $0x70] sm:$0xff]
    %v52 = vld [vmem:[%s1 + $0x78] sm:$0xff]
    %v53 = vld [vmem:[%s2] sm:$0x1]
    %v55 = vlaneseq
    %v56 = vshrl.u32 %v55, 7
    %v57 = vsub.s32 0, %v56
    %v58 = vrot.slane %v53, %v57
    %60 = vmatprep.subr.mxu0 0.0
    %61 = vmatpush1.msra.mxu0 %v37
    %62 = vmatprep.subr.mxu0 0.0
    %63 = vmatpush1.msra.mxu0 %v38
    %64 = vmatprep.subr.mxu0 0.0
    %65 = vmatpush1.msra.mxu0 %v39
    %66 = vmatprep.subr.mxu0 0.0
    %67 = vmatpush1.msra.mxu0 %v40
    %68 = vmatprep.subr.mxu0 0.0
    %69 = vmatpush1.msra.mxu0 %v41
    %70 = vmatprep.subr.mxu0 0.0
    %71 = vmatpush1.msra.mxu0 %v42
    %72 = vmatprep.subr.mxu0 0.0
    %73 = vmatpush1.msra.mxu0 %v43
    %74 = vmatprep.subr.mxu0 0.0
    %75 = vmatpush1.msra.mxu0 %v44
    %76 = vmatprep.subr.mxu0 0.0
    %77 = vmatpush1.msra.mxu0 %v45
    %78 = vmatprep.subr.mxu0 0.0
    %79 = vmatpush1.msra.mxu0 %v46
    %80 = vmatprep.subr.mxu0 0.0
    %81 = vmatpush1.msra.mxu0 %v47
    %82 = vmatprep.subr.mxu0 0.0
    %83 = vmatpush1.msra.mxu0 %v48
    %84 = vmatprep.subr.mxu0 0.0
    %85 = vmatpush1.msra.mxu0 %v49
    %86 = vmatprep.subr.mxu0 0.0
    %87 = vmatpush1.msra.mxu0 %v50
    %88 = vmatprep.subr.mxu0 0.0
    %89 = vmatpush1.msra.mxu0 %v51
    %90 = vmatprep.subr.mxu0 0.0
    %91 = vmatpush1.msra.mxu0 %v52
    %92 = vmatprep.subr.mxu0 0.0
    %93 = vmatpush1.msra.mxu0 0.0
    %94 = vmatprep.subr.mxu0 0.0
    %95 = vmatpush1.msra.mxu0 0.0
    %96 = vmatprep.subr.mxu0 0.0
    %97 = vmatpush1.msra.mxu0 0.0
    %98 = vmatprep.subr.mxu0 0.0
    %99 = vmatpush1.msra.mxu0 0.0
    %100 = vmatprep.subr.mxu0 0.0
    %101 = vmatpush1.msra.mxu0 0.0
    %102 = vmatprep.subr.mxu0 0.0
    %103 = vmatpush1.msra.mxu0 0.0
    %104 = vmatprep.subr.mxu0 0.0
    %105 = vmatpush1.msra.mxu0 0.0
    %106 = vmatprep.subr.mxu0 0.0
    %107 = vmatpush1.msra.mxu0 0.0
    %108 = vmatprep.subr.mxu0 0.0
    %109 = vmatpush1.msra.mxu0 0.0
    %110 = vmatprep.subr.mxu0 0.0
    %111 = vmatpush1.msra.mxu0 0.0
    %112 = vmatprep.subr.mxu0 0.0
    %113 = vmatpush1.msra.mxu0 0.0
    %114 = vmatprep.subr.mxu0 0.0
    %115 = vmatpush1.msra.mxu0 0.0
    %116 = vmatprep.subr.mxu0 0.0
    %117 = vmatpush1.msra.mxu0 0.0
    %118 = vmatprep.subr.mxu0 0.0
    %119 = vmatpush1.msra.mxu0 0.0
    %120 = vmatprep.subr.mxu0 0.0
    %121 = vmatpush1.msra.mxu0 0.0
    %122 = vmatprep.subr.mxu0 0.0
    %123 = vmatpush1.msra.mxu0 0.0
    %124 = vmatprep.mubr.f32.mxu0 0.0
    %125 = vmatmul.mubr.f32.gmra.mrb[0].mxu0 %v36
    %v126 = vpop.f32.mrb[0].mxu0
    %v127 = vadd.f32 %v58, %v126
    %v128 = vpop.f32.mrb[0].mxu0
    %129 = vdwg.mxu0
    %v130 = vmax.f32 %v127, 0.0
    %v131 = vld [vmem:[%s3] sm:$0xff]
    %v132 = vld [vmem:[%s3 + $0x8] sm:$0xff]
    %v133 = vld [vmem:[%s3 + $0x10] sm:$0xff]
    %v134 = vld [vmem:[%s3 + $0x18] sm:$0xff]
    %v135 = vld [vmem:[%s3 + $0x20] sm:$0xff]
    %v136 = vld [vmem:[%s3 + $0x28] sm:$0xff]
    %v137 = vld [vmem:[%s3 + $0x30] sm:$0xff]
    %v138 = vld [vmem:[%s3 + $0x38] sm:$0xff]
    %v139 = vld [vmem:[%s4] sm:$0x1]
    %v141 = vlaneseq
    %v142 = vshrl.u32 %v141, 7
    %v143 = vsub.s32 0, %v142
    %v144 = vrot.slane %v139, %v143
    %vm146 = vcmask 523264
    %v148 = vsel %vm146, %v130, 0
    %150 = vmatprep.subr.mxu0 0.0
    %151 = vmatpush1.msra.mxu0 %v131
    %152 = vmatprep.subr.mxu0 0.0
    %153 = vmatpush1.msra.mxu0 %v132
    %154 = vmatprep.subr.mxu0 0.0
    %155 = vmatpush1.msra.mxu0 %v133
    %156 = vmatprep.subr.mxu0 0.0
    %157 = vmatpush1.msra.mxu0 %v134
    %158 = vmatprep.subr.mxu0 0.0
    %159 = vmatpush1.msra.mxu0 %v135
    %160 = vmatprep.subr.mxu0 0.0
    %161 = vmatpush1.msra.mxu0 %v136
    %162 = vmatprep.subr.mxu0 0.0
    %163 = vmatpush1.msra.mxu0 %v137
    %164 = vmatprep.subr.mxu0 0.0
    %165 = vmatpush1.msra.mxu0 %v138
    %166 = vmatprep.subr.mxu0 0.0
    %167 = vmatpush1.msra.mxu0 0.0
    %168 = vmatprep.subr.mxu0 0.0
    %169 = vmatpush1.msra.mxu0 0.0
    %170 = vmatprep.subr.mxu0 0.0
    %171 = vmatpush1.msra.mxu0 0.0
    %172 = vmatprep.subr.mxu0 0.0
    %173 = vmatpush1.msra.mxu0 0.0
    %174 = vmatprep.subr.mxu0 0.0
    %175 = vmatpush1.msra.mxu0 0.0
    %176 = vmatprep.subr.mxu0 0.0
    %177 = vmatpush1.msra.mxu0 0.0
    %178 = vmatprep.subr.mxu0 0.0
    %179 = vmatpush1.msra.mxu0 0.0
    %180 = vmatprep.subr.mxu0 0.0
    %181 = vmatpush1.msra.mxu0 0.0
    %182 = vmatprep.subr.mxu0 0.0
    %183 = vmatpush1.msra.mxu0 0.0
    %184 = vmatprep.subr.mxu0 0.0
    %185 = vmatpush1.msra.mxu0 0.0
    %186 = vmatprep.subr.mxu0 0.0
    %187 = vmatpush1.msra.mxu0 0.0
    %188 = vmatprep.subr.mxu0 0.0
    %189 = vmatpush1.msra.mxu0 0.0
    %190 = vmatprep.subr.mxu0 0.0
    %191 = vmatpush1.msra.mxu0 0.0
    %192 = vmatprep.subr.mxu0 0.0
    %193 = vmatpush1.msra.mxu0 0.0
    %194 = vmatprep.subr.mxu0 0.0
    %195 = vmatpush1.msra.mxu0 0.0
    %196 = vmatprep.subr.mxu0 0.0
    %197 = vmatpush1.msra.mxu0 0.0
    %198 = vmatprep.subr.mxu0 0.0
    %199 = vmatpush1.msra.mxu0 0.0
    %200 = vmatprep.subr.mxu0 0.0
    %201 = vmatpush1.msra.mxu0 0.0
    %202 = vmatprep.subr.mxu0 0.0
    %203 = vmatpush1.msra.mxu0 0.0
    %204 = vmatprep.subr.mxu0 0.0
    %205 = vmatpush1.msra.mxu0 0.0
    %206 = vmatprep.subr.mxu0 0.0
    %207 = vmatpush1.msra.mxu0 0.0
    %208 = vmatprep.subr.mxu0 0.0
    %209 = vmatpush1.msra.mxu0 0.0
    %210 = vmatprep.subr.mxu0 0.0
    %211 = vmatpush1.msra.mxu0 0.0
    %212 = vmatprep.subr.mxu0 0.0
    %213 = vmatpush1.msra.mxu0 0.0
    %214 = vmatprep.mubr.f32.mxu0 0.0
    %215 = vmatmul.mubr.f32.gmra.mrb[0].mxu0 %v148
    %v216 = vpop.f32.mrb[0].mxu0
    %v217 = vadd.f32 %v144, %v216
    %v218 = vpop.f32.mrb[0].mxu0
    %219 = vdwg.mxu0
    %v220 = vmax.f32 %v217, 0.0
    %vm221 = vcmask 261120
    %v222 = vsel %vm221, %v220, 0.0
    %223 = vst [vmem:[#allocation4] sm:$0xff] %v222
    %v224 = vld [vmem:[%s5] sm:$0xff]
    %v225 = vld [vmem:[%s5 + $0x8] sm:$0xff]
    %v226 = vld [vmem:[%s5 + $0x10] sm:$0xff]
    %v227 = vld [vmem:[%s5 + $0x18] sm:$0xff]
    %v228 = vld [vmem:[%s6] sm:$0x1]
    %v230 = vlaneseq
    %v231 = vshrl.u32 %v230, 7
    %v232 = vsub.s32 0, %v231
    %v233 = vrot.slane %v228, %v232
    %v236 = vsel %vm221, %v220, 0
    %238 = vmatprep.subr.mxu0 0.0
    %239 = vmatpush1.msra.mxu0 %v224
    %240 = vmatprep.subr.mxu0 0.0
    %241 = vmatpush1.msra.mxu0 %v225
    %242 = vmatprep.subr.mxu0 0.0
    %243 = vmatpush1.msra.mxu0 %v226
    %244 = vmatprep.subr.mxu0 0.0
    %245 = vmatpush1.msra.mxu0 %v227
    %246 = vmatprep.subr.mxu0 0.0
    %247 = vmatpush1.msra.mxu0 0.0
    %248 = vmatprep.subr.mxu0 0.0
    %249 = vmatpush1.msra.mxu0 0.0
    %250 = vmatprep.subr.mxu0 0.0
    %251 = vmatpush1.msra.mxu0 0.0
    %252 = vmatprep.subr.mxu0 0.0
    %253 = vmatpush1.msra.mxu0 0.0
    %254 = vmatprep.subr.mxu0 0.0
    %255 = vmatpush1.msra.mxu0 0.0
    %256 = vmatprep.subr.mxu0 0.0
    %257 = vmatpush1.msra.mxu0 0.0
    %258 = vmatprep.subr.mxu0 0.0
    %259 = vmatpush1.msra.mxu0 0.0
    %260 = vmatprep.subr.mxu0 0.0
    %261 = vmatpush1.msra.mxu0 0.0
    %262 = vmatprep.subr.mxu0 0.0
    %263 = vmatpush1.msra.mxu0 0.0
    %264 = vmatprep.subr.mxu0 0.0
    %265 = vmatpush1.msra.mxu0 0.0
    %266 = vmatprep.subr.mxu0 0.0
    %267 = vmatpush1.msra.mxu0 0.0
    %268 = vmatprep.subr.mxu0 0.0
    %269 = vmatpush1.msra.mxu0 0.0
    %270 = vmatprep.subr.mxu0 0.0
    %271 = vmatpush1.msra.mxu0 0.0
    %272 = vmatprep.subr.mxu0 0.0
    %273 = vmatpush1.msra.mxu0 0.0
    %274 = vmatprep.subr.mxu0 0.0
    %275 = vmatpush1.msra.mxu0 0.0
    %276 = vmatprep.subr.mxu0 0.0
    %277 = vmatpush1.msra.mxu0 0.0
    %278 = vmatprep.subr.mxu0 0.0
    %279 = vmatpush1.msra.mxu0 0.0
    %280 = vmatprep.subr.mxu0 0.0
    %281 = vmatpush1.msra.mxu0 0.0
    %282 = vmatprep.subr.mxu0 0.0
    %283 = vmatpush1.msra.mxu0 0.0
    %284 = vmatprep.subr.mxu0 0.0
    %285 = vmatpush1.msra.mxu0 0.0
    %286 = vmatprep.subr.mxu0 0.0
    %287 = vmatpush1.msra.mxu0 0.0
    %288 = vmatprep.subr.mxu0 0.0
    %289 = vmatpush1.msra.mxu0 0.0
    %290 = vmatprep.subr.mxu0 0.0
    %291 = vmatpush1.msra.mxu0 0.0
    %292 = vmatprep.subr.mxu0 0.0
    %293 = vmatpush1.msra.mxu0 0.0
    %294 = vmatprep.subr.mxu0 0.0
    %295 = vmatpush1.msra.mxu0 0.0
    %296 = vmatprep.subr.mxu0 0.0
    %297 = vmatpush1.msra.mxu0 0.0
    %298 = vmatprep.subr.mxu0 0.0
    %299 = vmatpush1.msra.mxu0 0.0
    %300 = vmatprep.subr.mxu0 0.0
    %301 = vmatpush1.msra.mxu0 0.0
    %302 = vmatprep.mubr.f32.mxu0 0.0
    %303 = vmatmul.mubr.f32.gmra.mrb[0].mxu0 %v236
    %v304 = vpop.f32.mrb[0].mxu0
    %v305 = vadd.f32 %v233, %v304
    %v306 = vpop.f32.mrb[0].mxu0
    %307 = vdwg.mxu0
    %v308 = vmax.f32 %v305, 0.0
    %v309 = vld [vmem:[%s7] sm:$0xff]
    %v310 = vld [vmem:[%s7 + $0x8] sm:$0xff]
    %v311 = vld [vmem:[%s7 + $0x10] sm:$0xff]
    %v312 = vld [vmem:[%s7 + $0x18] sm:$0xff]
    %v313 = vld [vmem:[%s7 + $0x20] sm:$0xff]
    %v314 = vld [vmem:[%s7 + $0x28] sm:$0xff]
    %v315 = vld [vmem:[%s7 + $0x30] sm:$0xff]
    %v316 = vld [vmem:[%s7 + $0x38] sm:$0xff]
    %v317 = vld [vmem:[%s8] sm:$0x1]
    %v319 = vlaneseq
    %v320 = vshrl.u32 %v319, 7
    %v321 = vsub.s32 0, %v320
    %v322 = vrot.slane %v317, %v321
    %v325 = vsel %vm146, %v308, 0
    %327 = vmatprep.subr.mxu0 0.0
    %328 = vmatpush1.msra.mxu0 %v309
    %329 = vmatprep.subr.mxu0 0.0
    %330 = vmatpush1.msra.mxu0 %v310
    %331 = vmatprep.subr.mxu0 0.0
    %332 = vmatpush1.msra.mxu0 %v311
    %333 = vmatprep.subr.mxu0 0.0
    %334 = vmatpush1.msra.mxu0 %v312
    %335 = vmatprep.subr.mxu0 0.0
    %336 = vmatpush1.msra.mxu0 %v313
    %337 = vmatprep.subr.mxu0 0.0
    %338 = vmatpush1.msra.mxu0 %v314
    %339 = vmatprep.subr.mxu0 0.0
    %340 = vmatpush1.msra.mxu0 %v315
    %341 = vmatprep.subr.mxu0 0.0
    %342 = vmatpush1.msra.mxu0 %v316
    %343 = vmatprep.subr.mxu0 0.0
    %344 = vmatpush1.msra.mxu0 0.0
    %345 = vmatprep.subr.mxu0 0.0
    %346 = vmatpush1.msra.mxu0 0.0
    %347 = vmatprep.subr.mxu0 0.0
    %348 = vmatpush1.msra.mxu0 0.0
    %349 = vmatprep.subr.mxu0 0.0
    %350 = vmatpush1.msra.mxu0 0.0
    %351 = vmatprep.subr.mxu0 0.0
    %352 = vmatpush1.msra.mxu0 0.0
    %353 = vmatprep.subr.mxu0 0.0
    %354 = vmatpush1.msra.mxu0 0.0
    %355 = vmatprep.subr.mxu0 0.0
    %356 = vmatpush1.msra.mxu0 0.0
    %357 = vmatprep.subr.mxu0 0.0
    %358 = vmatpush1.msra.mxu0 0.0
    %359 = vmatprep.subr.mxu0 0.0
    %360 = vmatpush1.msra.mxu0 0.0
    %361 = vmatprep.subr.mxu0 0.0
    %362 = vmatpush1.msra.mxu0 0.0
    %363 = vmatprep.subr.mxu0 0.0
    %364 = vmatpush1.msra.mxu0 0.0
    %365 = vmatprep.subr.mxu0 0.0
    %366 = vmatpush1.msra.mxu0 0.0
    %367 = vmatprep.subr.mxu0 0.0
    %368 = vmatpush1.msra.mxu0 0.0
    %369 = vmatprep.subr.mxu0 0.0
    %370 = vmatpush1.msra.mxu0 0.0
    %371 = vmatprep.subr.mxu0 0.0
    %372 = vmatpush1.msra.mxu0 0.0
    %373 = vmatprep.subr.mxu0 0.0
    %374 = vmatpush1.msra.mxu0 0.0
    %375 = vmatprep.subr.mxu0 0.0
    %376 = vmatpush1.msra.mxu0 0.0
    %377 = vmatprep.subr.mxu0 0.0
    %378 = vmatpush1.msra.mxu0 0.0
    %379 = vmatprep.subr.mxu0 0.0
    %380 = vmatpush1.msra.mxu0 0.0
    %381 = vmatprep.subr.mxu0 0.0
    %382 = vmatpush1.msra.mxu0 0.0
    %383 = vmatprep.subr.mxu0 0.0
    %384 = vmatpush1.msra.mxu0 0.0
    %385 = vmatprep.subr.mxu0 0.0
    %386 = vmatpush1.msra.mxu0 0.0
    %387 = vmatprep.subr.mxu0 0.0
    %388 = vmatpush1.msra.mxu0 0.0
    %389 = vmatprep.subr.mxu0 0.0
    %390 = vmatpush1.msra.mxu0 0.0
    %391 = vmatprep.mubr.f32.mxu0 0.0
    %392 = vmatmul.mubr.f32.gmra.mrb[0].mxu0 %v325
    %v393 = vpop.f32.mrb[0].mxu0
    %v394 = vadd.f32 %v322, %v393
    %v395 = vpop.f32.mrb[0].mxu0
    %396 = vdwg.mxu0
    %v397 = vmax.f32 %v394, 0.0
    %398 = vst [vmem:[#allocation2] sm:$0xff] %v397
    // Predicated region
    $region38: #{auto_encoder_forward.1} parent=1 // pred_check
      _
    $region39: #{auto_encoder_forward.1} parent=1 // pred_check_branch
      %400 = sbr.rel (0) target = $region41
    $region40: #{auto_encoder_forward.1} parent=1 // pred_region
      %s402 = ssub.s32 128, 128
      %403 = vsyncadd [#allocation3], %s402
      %s405 = sshll.u32 [#allocation2], 4
      %s406 = int_to_ptr.vmem [resolvable:$true] %s405
      %408 = dma.vmem_to_hbm [thread:$0]  %s406, 128, %s9, [#allocation3]
    $region41: #{auto_encoder_forward.1} parent=1 // pred_fallthru
      _
    // Predicated region
    $region42: #{auto_encoder_forward.1} parent=1 // pred_check
      _
    $region43: #{auto_encoder_forward.1} parent=1 // pred_check_branch
      %410 = sbr.rel (0) target = $region45
    $region44: #{auto_encoder_forward.1} parent=1 // pred_region
      %s412 = ssub.s32 128, 128
      %413 = vsyncadd [#allocation5], %s412
      %s415 = sshll.u32 [#allocation4], 4
      %s416 = int_to_ptr.vmem [resolvable:$true] %s415
      %418 = dma.vmem_to_hbm [thread:$0]  %s416, 128, %s10, [#allocation5]
    $region45: #{auto_encoder_forward.1} parent=1 // pred_fallthru
      _
    // Predicated region
    $region46: #{auto_encoder_forward.1} parent=1 // pred_check
      _
    $region47: #{auto_encoder_forward.1} parent=1 // pred_check_branch
      %420 = sbr.rel (0) target = $region49
    $region48: #{auto_encoder_forward.1} parent=1 // pred_region
      %421 = dma.done [#allocation3], 128
    $region49: #{auto_encoder_forward.1} parent=1 // pred_fallthru
      _
    // Predicated region
    $region50: #{auto_encoder_forward.1} parent=1 // pred_check
      _
    $region51: #{auto_encoder_forward.1} parent=1 // pred_check_branch
      %423 = sbr.rel (0) target = $region53
    $region52: #{auto_encoder_forward.1} parent=1 // pred_region
      %424 = dma.done [#allocation5], 128
    $region53: #{auto_encoder_forward.1} parent=1 // pred_fallthru
      _
    %425 = vsyncpa [#allocation3], 1
    %426 = vsyncpa [#allocation5], 1

</llo_original>
